<compile_context>
chip_gen: v7x
topology: tpu7x:2x2x1
jax: 0.10.0
libtpu: 0.0.40
codegen_flags: <defaults>
</compile_context>

<pallas_src>
import functools

import jax
import jax.numpy as jnp
from jax import lax
from jax.experimental import pallas as pl
from jax.experimental.pallas import tpu as pltpu

LANE = 128
SUBLANE = 8
CHUNK = SUBLANE * LANE      # 1024 elements = one (8, 128) f32 slab
N_ACC = 8                   # chunks per inner-loop step == independent acc chains


def _cdiv(a, b):
    return -(-a // b)


@functools.lru_cache(maxsize=1)
def _tpu_config():
    """Return (num_cores, scoped_vmem_bytes, core_axis_semantics) for this chip."""
    kind = ""
    try:
        kind = jax.devices()[0].device_kind.lower()
    except Exception:
        pass

    num_cores = 1
    scoped_vmem = 16 << 20                       # conservative default
    core_sem = getattr(pltpu, "PARALLEL", "parallel")

    if ("v5e" in kind) or ("v5 lite" in kind) or ("v5lite" in kind):
        num_cores, scoped_vmem = 1, 16 << 20     # v5e: 1 TC, 16 MiB scoped default
    elif "v6" in kind:
        num_cores, scoped_vmem = 1, 32 << 20     # v6e: 1 TC, 32 MiB scoped default
    elif ("v5p" in kind) or ("v4" in kind) or ("v5" in kind):
        num_cores, scoped_vmem = 2, 16 << 20     # megacore: 2 TCs share the grid
    elif ("v7" in kind) or ("7x" in kind):
        num_cores, scoped_vmem = 2, 32 << 20     # v7x: 2 TCs, 64 MiB phys / 32 MiB scoped
        core_sem = getattr(pltpu, "CORE_PARALLEL", core_sem)
    elif ("v2" in kind) or ("v3" in kind):
        num_cores, scoped_vmem = 1, 16 << 20

    return num_cores, scoped_vmem, core_sem


def _make_mse_kernel(*, n_chunks, tile_chunks, n_acc, tiles_per_core,
                     total_tiles, num_cores, ragged, has_overhang):
    """Accumulate sum((fs - ft)^2) into one (8,128) f32 partial block per core."""
    n_sub = tile_chunks // n_acc
    unroll = 2 if (n_sub >= 2 and n_sub % 2 == 0) else 1

    def kernel(fs_ref, ft_ref, o_ref):
        if num_cores > 1:
            c = pl.program_id(0)        # core (parallel) axis
            i = pl.program_id(1)        # reduction (arbitrary) axis
        else:
            c = 0
            i = pl.program_id(0)
        t = c * tiles_per_core + i      # intended global tile index

        @pl.when(i == 0)
        def _init():
            o_ref[...] = jnp.zeros_like(o_ref)

        def accumulate(mask_tail):
            # Stream the tile in (n_acc, 8, 128) sub-slices, carrying n_acc
            # independent partial-sum chains in registers (no big VMEM temps).
            def body(j, acc):
                off = pl.multiple_of(j * n_acc, n_acc)
                a = fs_ref[pl.ds(off, n_acc)].astype(jnp.float32)
                b = ft_ref[pl.ds(off, n_acc)].astype(jnp.float32)
                d = a - b
                sq = d * d
                if mask_tail:
                    ids = (t * tile_chunks + off) + lax.broadcasted_iota(
                        jnp.int32, sq.shape, 0)
                    sq = jnp.where(ids < n_chunks, sq, 0.0)
                return acc + sq

            init = jnp.zeros((n_acc, SUBLANE, LANE), jnp.float32)
            part = lax.fori_loop(0, n_sub, body, init, unroll=unroll)
            # Fold the n_acc chains once per grid step (a few VPU adds).
            o_ref[...] += jnp.sum(part, axis=0)

        if ragged:
            @pl.when(t == total_tiles - 1)       # masked tail tile only
            def _tail():
                accumulate(True)

            @pl.when(t < total_tiles - 1)        # clean interior tiles
            def _interior():
                accumulate(False)
        elif has_overhang:
            @pl.when(t < total_tiles)            # skip fully-overhang tiles
            def _real():
                accumulate(False)
        else:
            accumulate(False)                    # hot path: no gating at all

    return kernel


@jax.jit
def hint_loss_forward(fs, ft):
    """Pallas implementation of HintLoss.forward: mean((fs - ft) ** 2)."""
    assert fs.shape == ft.shape, "fs and ft must have identical shapes"
    n_true = fs.size
    assert n_true > 0

    num_cores, scoped_vmem, core_sem = _tpu_config()

    # Keep native dtype; the kernel upcasts per 8-chunk sub-slice.
    fs_flat = jnp.reshape(fs, (-1,))
    ft_flat = jnp.reshape(ft, (-1,))

    # Pad only to 1024-element granularity so the data views as a lane-dense
    # (n_chunks, 8, 128) slab.  Zero padding in BOTH tensors contributes 0 to
    # the sum; no copy at all when n_true is already a multiple of 1024.
    pad = (-n_true) % CHUNK
    if pad:
        fs_flat = jnp.pad(fs_flat, (0, pad))
        ft_flat = jnp.pad(ft_flat, (0, pad))

    n_chunks = fs_flat.size // CHUNK
    fs3 = fs_flat.reshape(n_chunks, SUBLANE, LANE)
    ft3 = ft_flat.reshape(n_chunks, SUBLANE, LANE)

    # Chip/dtype-aware block size: 2 inputs x 2 pipeline buffers <= scoped/2.
    # f32 -> 1024 chunks (4 MiB blocks) on v6e/v7x, 512 on v5e; bf16 doubles it.
    in_bytes = jnp.dtype(fs.dtype).itemsize + jnp.dtype(ft.dtype).itemsize
    budget_chunks = max(1, scoped_vmem // (4 * CHUNK * in_bytes))
    tile_chunks = max(1, min(int(budget_chunks), n_chunks))
    if tile_chunks >= N_ACC:
        tile_chunks = (tile_chunks // N_ACC) * N_ACC
        n_acc = N_ACC
    else:
        n_acc = tile_chunks

    total_tiles = _cdiv(n_chunks, tile_chunks)
    if total_tiles < num_cores:
        num_cores = 1                    # not enough tiles to split across TCs
    tiles_per_core = _cdiv(total_tiles, num_cores)
    ragged = (n_chunks % tile_chunks) != 0
    has_overhang = num_cores * tiles_per_core > total_tiles

    kernel = _make_mse_kernel(
        n_chunks=n_chunks, tile_chunks=tile_chunks, n_acc=n_acc,
        tiles_per_core=tiles_per_core, total_tiles=total_tiles,
        num_cores=num_cores, ragged=ragged, has_overhang=has_overhang)

    block = (tile_chunks, SUBLANE, LANE)
    if num_cores > 1:
        grid = (num_cores, tiles_per_core)

        def in_map(c, i):
            t = c * tiles_per_core + i
            # Clamp so overhang tiles never start out of bounds; they are
            # skipped inside the kernel anyway.
            return (jnp.minimum(t, total_tiles - 1), 0, 0)

        out_map = lambda c, i: (c, 0, 0)
        dim_sem = (core_sem, pltpu.ARBITRARY)
    else:
        grid = (tiles_per_core,)
        in_map = lambda i: (i, 0, 0)
        out_map = lambda i: (0, 0, 0)
        dim_sem = (pltpu.ARBITRARY,)

    partials = pl.pallas_call(
        kernel,
        out_shape=jax.ShapeDtypeStruct((num_cores, SUBLANE, LANE), jnp.float32),
        grid_spec=pltpu.PrefetchScalarGridSpec(
            num_scalar_prefetch=0,
            grid=grid,
            in_specs=[pl.BlockSpec(block, in_map),
                      pl.BlockSpec(block, in_map)],
            out_specs=pl.BlockSpec((None, SUBLANE, LANE), out_map),
        ),
        compiler_params=pltpu.CompilerParams(dimension_semantics=dim_sem),
    )(fs3, ft3)

    return jnp.sum(partials) / jnp.float32(n_true)


class HintLossPallas:
    """Mirror of the PyTorch HintLoss module (deterministic init)."""

    def __init__(self, initial_T, temperature=0.07):
        # nn.Parameter(torch.tensor(initial_T, dtype=torch.float32)); unused in
        # forward, kept only for module parity.
        self.T = jnp.asarray(initial_T, dtype=jnp.float32)
        self.temperature = temperature  # unused in forward

    def __call__(self, fs, ft):
        return hint_loss_forward(fs, ft)

    def get_temperature(self):
        return float(self.T)

    def set_temperature(self, new_T):
        self.T = jnp.asarray(new_T, dtype=jnp.float32)


if __name__ == "__main__":
    key = jax.random.PRNGKey(0)
    k_fs, k_ft = jax.random.split(key)

    # Student / teacher feature maps (NCHW): batch=2, channels=4, spatial 16x16.
    fs = jax.random.normal(k_fs, (2, 4, 16, 16), dtype=jnp.float32)
    ft = jax.random.normal(k_ft, (2, 4, 16, 16), dtype=jnp.float32)

    loss_mod = HintLossPallas(initial_T=4.0)
    loss = loss_mod(fs, ft)
    jax.block_until_ready(loss)
    ref = jnp.mean((fs - ft) ** 2)
    assert jnp.allclose(loss, ref, rtol=1e-6, atol=1e-6), (loss, ref)

    # Ragged size (not a multiple of 1024) -> exercises the padding path.
    fs_r = jax.random.normal(k_fs, (3, 5, 9, 7), dtype=jnp.float32)
    ft_r = jax.random.normal(k_ft, (3, 5, 9, 7), dtype=jnp.float32)
    loss_r = hint_loss_forward(fs_r, ft_r)
    jax.block_until_ready(loss_r)
    ref_r = jnp.mean((fs_r - ft_r) ** 2)
    assert jnp.allclose(loss_r, ref_r, rtol=1e-6, atol=1e-6), (loss_r, ref_r)

    # Multi-tile case -> exercises the grid loop + gated masked-tail path.
    fs_m = jax.random.normal(k_fs, (4, 32, 33, 33), dtype=jnp.float32)
    ft_m = jax.random.normal(k_ft, (4, 32, 33, 33), dtype=jnp.float32)
    loss_m = hint_loss_forward(fs_m, ft_m)
    jax.block_until_ready(loss_m)
    ref_m = jnp.mean((fs_m - ft_m) ** 2)
    assert jnp.allclose(loss_m, ref_m, rtol=1e-5, atol=1e-6), (loss_m, ref_m)

    # bf16 inputs -> exercises the in-kernel upcast path (dtype-aware tiling).
    fs_b = fs_m.astype(jnp.bfloat16)
    ft_b = ft_m.astype(jnp.bfloat16)
    loss_b = hint_loss_forward(fs_b, ft_b)
    jax.block_until_ready(loss_b)
    ref_b = jnp.mean((fs_b.astype(jnp.float32) - ft_b.astype(jnp.float32)) ** 2)
    assert jnp.allclose(loss_b, ref_b, rtol=1e-5, atol=1e-6), (loss_b, ref_b)

    print("KERNEL_OK")
</pallas_src>

<mosaic_0001>
module attributes {stable_mosaic.version = 11 : i64} {
  func.func @kernel(%arg0: i32, %arg1: memref<2x8x128xf32, #tpu.memory_space<vmem>>, %arg2: memref<2x8x128xf32, #tpu.memory_space<vmem>>, %arg3: memref<1x8x128xf32, #tpu.memory_space<vmem>>) attributes {dimension_semantics = [#tpu.dimension_semantics<arbitrary>], iteration_bounds = array<i64: 1>, scalar_prefetch = 0 : i64, scratch_operands = 0 : i64, tpu.core_type = #tpu.core_type<tc>, window_params = [{transform_indices = @transform_0, window_bounds = array<i64: 2, 8, 128>}, {transform_indices = @transform_1, window_bounds = array<i64: 2, 8, 128>}, {pipeline_mode = #tpu.pipeline_mode<synchronous>, transform_indices = @transform_2, window_bounds = array<i64: 1, 8, 128>}]} {
    %c0_i32 = arith.constant 0 : i32
    %0 = arith.cmpi eq, %arg0, %c0_i32 : i32
    %1 = arith.extui %0 : i1 to i32
    %c0_i32_0 = arith.constant 0 : i32
    %2 = arith.cmpi ne, %1, %c0_i32_0 : i32
    scf.if %2 {
      %cst_12 = arith.constant 0.000000e+00 : f32
      %20 = vector.broadcast %cst_12 : f32 to vector<8x128xf32>
      %c0_13 = arith.constant 0 : index
      %c0_14 = arith.constant 0 : index
      %c0_15 = arith.constant 0 : index
      %21 = vector.load %arg3[%c0_13, %c0_14, %c0_15] : memref<1x8x128xf32, #tpu.memory_space<vmem>>, vector<1x8x128xf32>
      %22 = vector.shape_cast %21 : vector<1x8x128xf32> to vector<8x128xf32>
      %23 = vector.shape_cast %20 : vector<8x128xf32> to vector<1x8x128xf32>
      tpu.vector_store %arg3[%c0_13, %c0_14, %c0_15], %23 {strides = array<i32>} : memref<1x8x128xf32, #tpu.memory_space<vmem>>, vector<1x8x128xf32>,
    } else {
    }
    %cst = arith.constant 0.000000e+00 : f32
    %3 = vector.broadcast %cst : f32 to vector<2x8x128xf32>
    %c0_i32_1 = arith.constant 0 : i32
    %c2_i32 = arith.constant 2 : i32
    %4 = arith.muli %c0_i32_1, %c2_i32 : i32
    %5 = tpu.assume_multiple %4, 2 : i32
    %6 = arith.index_cast %5 : i32 to index
    %c0 = arith.constant 0 : index
    %c0_2 = arith.constant 0 : index
    %7 = vector.load %arg1[%6, %c0, %c0_2] : memref<2x8x128xf32, #tpu.memory_space<vmem>>, vector<2x8x128xf32>
    %8 = arith.index_cast %5 : i32 to index
    %c0_3 = arith.constant 0 : index
    %c0_4 = arith.constant 0 : index
    %9 = vector.load %arg2[%8, %c0_3, %c0_4] : memref<2x8x128xf32, #tpu.memory_space<vmem>>, vector<2x8x128xf32>
    %10 = arith.subf %7, %9 : vector<2x8x128xf32>
    %11 = arith.mulf %10, %10 : vector<2x8x128xf32>
    %12 = arith.addf %3, %11 : vector<2x8x128xf32>
    %c1_i32 = arith.constant 1 : i32
    %c0_5 = arith.constant 0 : index
    %c0_6 = arith.constant 0 : index
    %c0_7 = arith.constant 0 : index
    %13 = vector.load %arg3[%c0_5, %c0_6, %c0_7] : memref<1x8x128xf32, #tpu.memory_space<vmem>>, vector<1x8x128xf32>
    %14 = vector.shape_cast %13 : vector<1x8x128xf32> to vector<8x128xf32>
    %cst_8 = arith.constant dense<0.000000e+00> : vector<8x128xf32>
    %15 = vector.multi_reduction <add>, %12, %cst_8 [0] : vector<2x8x128xf32> to vector<8x128xf32>
    %16 = arith.addf %14, %15 : vector<8x128xf32>
    %c0_9 = arith.constant 0 : index
    %c0_10 = arith.constant 0 : index
    %c0_11 = arith.constant 0 : index
    %17 = vector.load %arg3[%c0_9, %c0_10, %c0_11] : memref<1x8x128xf32, #tpu.memory_space<vmem>>, vector<1x8x128xf32>
    %18 = vector.shape_cast %17 : vector<1x8x128xf32> to vector<8x128xf32>
    %19 = vector.shape_cast %16 : vector<8x128xf32> to vector<1x8x128xf32>
    tpu.vector_store %arg3[%c0_9, %c0_10, %c0_11], %19 {strides = array<i32>} : memref<1x8x128xf32, #tpu.memory_space<vmem>>, vector<1x8x128xf32>,
    return
  }
  func.func @transform_0(%arg0: i32) -> (i32, i32, i32) {
    %c0_i32 = arith.constant 0 : i32
    %c0_i32_0 = arith.constant 0 : i32
    %c0_i32_1 = arith.constant 0 : i32
    return %arg0, %c0_i32, %c0_i32_0 : i32, i32, i32
  }
  func.func @transform_1(%arg0: i32) -> (i32, i32, i32) {
    %c0_i32 = arith.constant 0 : i32
    %c0_i32_0 = arith.constant 0 : i32
    %c0_i32_1 = arith.constant 0 : i32
    return %arg0, %c0_i32, %c0_i32_0 : i32, i32, i32
  }
  func.func @transform_2(%arg0: i32) -> (i32, i32, i32) {
    %c0_i32 = arith.constant 0 : i32
    %c0_i32_0 = arith.constant 0 : i32
    %c0_i32_1 = arith.constant 0 : i32
    %c0_i32_2 = arith.constant 0 : i32
    return %c0_i32, %c0_i32_0, %c0_i32_1 : i32, i32, i32
  }
}

</mosaic_0001>

<llo_original>
// kernel: hint_loss_forward.1
$region0: #{hint_loss_forward.1}
  #allocation0 [shape = 'u32[]', space=smem, size = 0x4, offset = 0x4, fixed_abs, tag = 'smem constant byte address 0x4 - core index']
  #allocation1 [shape = 'u32[144,128]{1,0:T(1,128)}', space=vmem, size = 0x12000, scoped, tag = 'internal scratch']
  %s0 = inlined_call_operand.vmem [shape: f32[2,8,128], index: 0, kind: input, shape index: {}]
  %s1 = inlined_call_operand.vmem [shape: f32[2,8,128], index: 1, kind: input, shape index: {}]
  %s2 = inlined_call_operand.vmem [shape: f32[1,8,128], index: 2, kind: output, shape index: {}]
  %s3 = sld [smem:[#allocation0]]
  $region22: #{hint_loss_forward.1} parent=0
    _
  %s5 = ssub.s32 1, %s3
  %s6 = scalar_select 0, %s5, %s3
  // Predicated region
  $region2: #{hint_loss_forward.1} parent=0 // pred_check
    _
  $region3: #{hint_loss_forward.1} parent=0 // pred_check_branch
    %8 = sbr.rel (0) target = $region5
  $region4: #{hint_loss_forward.1} parent=0 // pred_region
    _
  $region5: #{hint_loss_forward.1} parent=0 // pred_fallthru
    _
  // Predicated region
  $region6: #{hint_loss_forward.1} parent=0 // pred_check
    _
  $region7: #{hint_loss_forward.1} parent=0 // pred_check_branch
    %10 = sbr.rel (0) target = $region9
  $region8: #{hint_loss_forward.1} parent=0 // pred_region
    _
  $region9: #{hint_loss_forward.1} parent=0 // pred_fallthru
    _
  %p11 = scmp.eq.s32.totalorder 0, 0
  // Predicated region
  $region10: #{hint_loss_forward.1} parent=0 // pred_check
    %p12 = pneg %p11
  $region11: #{hint_loss_forward.1} parent=0 // pred_check_branch
    %14 = sbr.rel (%p12) target = $region13
  $region12: #{hint_loss_forward.1} parent=0 // pred_region
    %15 = vst [vmem:[%s2] sm:$0xff] 0.0
  $region13: #{hint_loss_forward.1} parent=0 // pred_fallthru
    _
  %s16 = smul.u32 0, 8
  %s17 = scalar_lea.vmem %s0, %s16
  %v18 = vld [vmem:[%s17] sm:$0xff]
  %v19 = vld [vmem:[%s17 + $0x8] sm:$0xff]
  %s20 = scalar_lea.vmem %s1, %s16
  %v21 = vld [vmem:[%s20] sm:$0xff]
  %v22 = vld [vmem:[%s20 + $0x8] sm:$0xff]
  %v23 = vsub.f32 %v18, %v21
  %v24 = vsub.f32 %v19, %v22
  %v25 = vmul.f32 %v23, %v23
  %v26 = vmul.f32 %v24, %v24
  %v27 = vadd.f32 %v25, 0.0
  %v28 = vadd.f32 %v26, 0.0
  %v29 = vld [vmem:[%s2] sm:$0xff]
  %v30 = vadd.f32 %v27, %v28
  %v31 = vadd.f32 %v29, %v30
  %32 = vst [vmem:[%s2] sm:$0xff] %v31
  // Predicated region
  $region14: #{hint_loss_forward.1} parent=0 // pred_check
    _
  $region15: #{hint_loss_forward.1} parent=0 // pred_check_branch
    %34 = sbr.rel (0) target = $region17
  $region16: #{hint_loss_forward.1} parent=0 // pred_region
    _
  $region17: #{hint_loss_forward.1} parent=0 // pred_fallthru
    _
  // Predicated region
  $region18: #{hint_loss_forward.1} parent=0 // pred_check
    _
  $region19: #{hint_loss_forward.1} parent=0 // pred_check_branch
    %36 = sbr.rel (0) target = $region21
  $region20: #{hint_loss_forward.1} parent=0 // pred_region
    _
  $region21: #{hint_loss_forward.1} parent=0 // pred_fallthru
    _

</llo_original>
